<compile_context>
chip_gen: v7x
topology: tpu7x:2x2x1
jax: 0.10.0
libtpu: 0.0.40
codegen_flags: <defaults>
</compile_context>

<pallas_src>
import jax
import jax.numpy as jnp
from jax.experimental import pallas as pl
from jax.experimental.pallas import tpu as pltpu

_LANE = 128


def _round_up(x, m):
    return ((x + m - 1) // m) * m


def _sublane_multiple(dtype):
    # Native sublane tiling: f32 -> 8, bf16 -> 16, int8/fp8 -> 32.
    return max(8, 32 // jnp.dtype(dtype).itemsize)


def _mlp_probe_kernel(x_ref, w1_ref, b1_ref, w2_ref, b2_ref, w3_ref, b3_ref, o_ref):
    # x_ref: (TM, D) row tile of token representations (compute dtype).
    # Dots feed the MXU in the (possibly bf16) compute dtype; accumulation,
    # bias adds and ReLU stay in f32.
    x = x_ref[...]
    h = jnp.dot(x, w1_ref[...], preferred_element_type=jnp.float32) + b1_ref[...]
    h = jnp.maximum(h, 0.0)
    h = jnp.dot(h.astype(w2_ref.dtype), w2_ref[...],
                preferred_element_type=jnp.float32) + b2_ref[...]
    h = jnp.maximum(h, 0.0)
    out = jnp.dot(h.astype(w3_ref.dtype), w3_ref[...],
                  preferred_element_type=jnp.float32) + b3_ref[...]
    o_ref[...] = out.astype(o_ref.dtype)


def prepare_probe_params(params, compute_dtype=jnp.bfloat16):
    """One-time preprocessing.

    * Transpose PyTorch (out, in) weights to (in, out).
    * Zero-pad both the hidden-rank axis R and the label axis L up to 128
      lanes so every activation / store is lane-dense.  Padding is exact:
      zero weight rows/cols contribute nothing and relu(0) = 0.
    * Cast weights to `compute_dtype` (bf16 by default, MXU-native); biases
      stay in f32 since they are added to the f32 accumulator.
    """
    w1, b1, w2, b2, w3, b3 = params          # PyTorch layout: Wk is (out, in)
    R, D = w1.shape
    L = w3.shape[0]
    Rp = _round_up(max(R, _LANE), _LANE)
    Lp = _round_up(max(L, _LANE), _LANE)

    w1t = jnp.zeros((D, Rp), compute_dtype).at[:, :R].set(
        jnp.asarray(w1, compute_dtype).T)
    b1r = jnp.zeros((1, Rp), jnp.float32).at[:, :R].set(
        jnp.asarray(b1, jnp.float32).reshape(1, -1))
    w2t = jnp.zeros((Rp, Rp), compute_dtype).at[:R, :R].set(
        jnp.asarray(w2, compute_dtype).T)
    b2r = jnp.zeros((1, Rp), jnp.float32).at[:, :R].set(
        jnp.asarray(b2, jnp.float32).reshape(1, -1))
    w3t = jnp.zeros((Rp, Lp), compute_dtype).at[:R, :L].set(
        jnp.asarray(w3, compute_dtype).T)
    b3r = jnp.zeros((1, Lp), jnp.float32).at[:, :L].set(
        jnp.asarray(b3, jnp.float32).reshape(1, -1))
    return (w1t, b1r, w2t, b2r, w3t, b3r, L, jnp.dtype(compute_dtype))


def _const_spec(shape):
    """Resident (constant-index) block: single-buffered to save VMEM."""
    idx = lambda i: (0,) * len(shape)
    try:
        return pl.BlockSpec(shape, idx, pipeline_mode=pl.Buffered(1))
    except Exception:                      # older API without pipeline_mode
        return pl.BlockSpec(shape, idx)


def one_word_nn_label_probe(batch, prepared_params, *, tm=1024):
    """batch: (B, S, D) -> logits (B, S, label_space_size)."""
    w1t, b1r, w2t, b2r, w3t, b3r, L, compute_dtype = prepared_params
    B, S, D = batch.shape
    Rp = w1t.shape[1]
    Lp = w3t.shape[1]
    out_dtype = batch.dtype

    rows = B * S
    x2d = batch.reshape(rows, D).astype(compute_dtype)

    dot_bytes = jnp.dtype(compute_dtype).itemsize
    out_bytes = jnp.dtype(out_dtype).itemsize
    sm = max(_sublane_multiple(compute_dtype), _sublane_multiple(out_dtype))

    # --- per-TensorCore VMEM budget -> row-tile size ------------------------
    try:
        vmem_cap = int(pltpu.get_tpu_info().vmem_capacity_bytes)
    except Exception:
        vmem_cap = 64 << 20                 # v7x per-TC floor; safe everywhere
    budget = int(vmem_cap * 0.55)

    # Single-buffered resident weights (+ f32 biases).
    weight_bytes = (D * Rp + Rp * Rp + Rp * Lp) * dot_bytes + (2 * Rp + Lp) * 4
    # Per-row streamed footprint: double-buffered x and out tiles plus the f32
    # activation temporaries of one tile.
    per_row = 2 * D * dot_bytes + 2 * Lp * out_bytes + (Rp + Lp) * 4
    avail = max(budget - weight_bytes - (4 << 20), per_row * sm)
    tm_budget = max(sm, (avail // per_row) // sm * sm)

    tm_eff = min(_round_up(tm, sm), tm_budget)
    # Keep >=2 grid steps whenever rows allow, so v7x's two TensorCores both
    # get work (no effect on single-TC v5e/v6e beyond a negligible extra step).
    tm_eff = min(tm_eff, max(sm, _round_up(pl.cdiv(rows, 2), sm)))
    tm_eff = max(sm, tm_eff)

    grid = (pl.cdiv(rows, tm_eff),)         # ragged last block masked by Pallas

    footprint = (2 * tm_eff * (D * dot_bytes + Lp * out_bytes)
                 + weight_bytes + tm_eff * (Rp + Lp) * 4 + (4 << 20))
    vmem_limit = int(min(max(footprint, 16 << 20), int(vmem_cap * 0.9)))

    flops = 2 * rows * (D * Rp + Rp * Rp + Rp * Lp)
    bytes_accessed = rows * (D * dot_bytes + Lp * out_bytes) + weight_bytes
    cost = pl.CostEstimate(flops=flops, transcendentals=0,
                           bytes_accessed=bytes_accessed)

    out2d = pl.pallas_call(
        _mlp_probe_kernel,
        out_shape=jax.ShapeDtypeStruct((rows, Lp), out_dtype),
        grid_spec=pltpu.PrefetchScalarGridSpec(
            num_scalar_prefetch=0,
            grid=grid,
            in_specs=[
                pl.BlockSpec((tm_eff, D), lambda i: (i, 0)),  # x row tile (streamed)
                _const_spec((D, Rp)),                         # W1^T (resident)
                _const_spec((1, Rp)),                         # b1
                _const_spec((Rp, Rp)),                        # W2^T
                _const_spec((1, Rp)),                         # b2
                _const_spec((Rp, Lp)),                        # W3^T (lane-padded)
                _const_spec((1, Lp)),                         # b3 (lane-padded)
            ],
            out_specs=pl.BlockSpec((tm_eff, Lp), lambda i: (i, 0)),
        ),
        compiler_params=pltpu.CompilerParams(
            dimension_semantics=("parallel",),
            vmem_limit_bytes=vmem_limit,
        ),
        cost_estimate=cost,
    )(x2d, w1t, b1r, w2t, b2r, w3t, b3r)

    return out2d[:, :L].reshape(B, S, L)


# ----------------------------- references / test -----------------------------

def _reference_f32(batch, params):
    w1, b1, w2, b2, w3, b3 = params
    h = jnp.maximum(batch @ w1.T + b1, 0.0)
    h = jnp.maximum(h @ w2.T + b2, 0.0)
    return h @ w3.T + b3


def _reference_compute(batch, params, compute_dtype):
    # Same rounding of inputs/weights as the kernel (f32 accumulation).
    w1, b1, w2, b2, w3, b3 = params
    x = batch.astype(compute_dtype)
    h = jnp.dot(x, w1.T.astype(compute_dtype),
                preferred_element_type=jnp.float32) + b1
    h = jnp.maximum(h, 0.0)
    h = jnp.dot(h.astype(compute_dtype), w2.T.astype(compute_dtype),
                preferred_element_type=jnp.float32) + b2
    h = jnp.maximum(h, 0.0)
    return jnp.dot(h.astype(compute_dtype), w3.T.astype(compute_dtype),
                   preferred_element_type=jnp.float32) + b3


def _init_linear(key, out_dim, in_dim):
    # Deterministic init mirroring nn.Linear's U(-1/sqrt(in), 1/sqrt(in)).
    kw, kb = jax.random.split(key)
    bound = 1.0 / jnp.sqrt(jnp.float32(in_dim))
    w = jax.random.uniform(kw, (out_dim, in_dim), jnp.float32, -bound, bound)
    b = jax.random.uniform(kb, (out_dim,), jnp.float32, -bound, bound)
    return w, b


if __name__ == "__main__":
    # Small config: hidden_dim=32, maximum_rank=16, label_space_size=8,
    # probe_hidden_layers=2 (=> one intermediate linear), dropout=0 (eval).
    B, S, D = 2, 8, 32
    R, L = 16, 8

    key = jax.random.PRNGKey(0)
    kx, k1, k2, k3 = jax.random.split(key, 4)

    batch = jax.random.normal(kx, (B, S, D), dtype=jnp.float32)
    w1, b1 = _init_linear(k1, R, D)
    w2, b2 = _init_linear(k2, R, R)
    w3, b3 = _init_linear(k3, L, R)
    params = (w1, b1, w2, b2, w3, b3)

    prepared = prepare_probe_params(params, compute_dtype=jnp.bfloat16)
    out = one_word_nn_label_probe(batch, prepared)
    out = jax.block_until_ready(out)

    assert out.shape == (B, S, L)
    ref_bf16 = _reference_compute(batch, params, jnp.bfloat16)
    ref_f32 = _reference_f32(batch, params)
    assert jnp.allclose(out, ref_bf16, atol=1e-2, rtol=1e-2), "mismatch vs bf16 reference"
    assert jnp.allclose(out, ref_f32, atol=7e-2, rtol=7e-2), "mismatch vs f32 reference"

    print("KERNEL_OK")
</pallas_src>

<mosaic_0001>
module attributes {stable_mosaic.version = 11 : i64} {
  func.func @_mlp_probe_kernel(%arg0: i32, %arg1: memref<16x32xbf16, #tpu.memory_space<vmem>>, %arg2: memref<32x128xbf16, #tpu.memory_space<vmem>>, %arg3: memref<1x128xf32, #tpu.memory_space<vmem>>, %arg4: memref<128x128xbf16, #tpu.memory_space<vmem>>, %arg5: memref<1x128xf32, #tpu.memory_space<vmem>>, %arg6: memref<128x128xbf16, #tpu.memory_space<vmem>>, %arg7: memref<1x128xf32, #tpu.memory_space<vmem>>, %arg8: memref<16x128xf32, #tpu.memory_space<vmem>>) attributes {dimension_semantics = [#tpu.dimension_semantics<parallel>], iteration_bounds = array<i64: 1>, scalar_prefetch = 0 : i64, scratch_operands = 0 : i64, tpu.core_type = #tpu.core_type<tc>, window_params = [{transform_indices = @transform_0, window_bounds = array<i64: 16, 32>}, {pipeline_mode = #tpu.pipeline_mode<synchronous>, transform_indices = @transform_1, window_bounds = array<i64: 32, 128>}, {pipeline_mode = #tpu.pipeline_mode<synchronous>, transform_indices = @transform_2, window_bounds = array<i64: 1, 128>}, {pipeline_mode = #tpu.pipeline_mode<synchronous>, transform_indices = @transform_3, window_bounds = array<i64: 128, 128>}, {pipeline_mode = #tpu.pipeline_mode<synchronous>, transform_indices = @transform_4, window_bounds = array<i64: 1, 128>}, {pipeline_mode = #tpu.pipeline_mode<synchronous>, transform_indices = @transform_5, window_bounds = array<i64: 128, 128>}, {pipeline_mode = #tpu.pipeline_mode<synchronous>, transform_indices = @transform_6, window_bounds = array<i64: 1, 128>}, {transform_indices = @transform_7, window_bounds = array<i64: 16, 128>}]} {
    %c0 = arith.constant 0 : index
    %c0_0 = arith.constant 0 : index
    %0 = vector.load %arg1[%c0, %c0_0] : memref<16x32xbf16, #tpu.memory_space<vmem>>, vector<16x32xbf16>
    %c0_1 = arith.constant 0 : index
    %c0_2 = arith.constant 0 : index
    %1 = vector.load %arg2[%c0_1, %c0_2] : memref<32x128xbf16, #tpu.memory_space<vmem>>, vector<32x128xbf16>
    %cst = arith.constant dense<0.000000e+00> : vector<16x128xf32>
    %2 = tpu.matmul %0, %1, %cst {dimension_numbers = #tpu.dot_dimension_numbers<[1], [0], [0], [1], [0, 0, 1, 1], [], []>} : vector<16x32xbf16>, vector<32x128xbf16>, vector<16x128xf32> -> vector<16x128xf32>
    %c0_3 = arith.constant 0 : index
    %c0_4 = arith.constant 0 : index
    %3 = vector.load %arg3[%c0_3, %c0_4] : memref<1x128xf32, #tpu.memory_space<vmem>>, vector<1x128xf32>
    %4 = vector.broadcast %3 : vector<1x128xf32> to vector<16x128xf32>
    %5 = arith.addf %2, %4 : vector<16x128xf32>
    %cst_5 = arith.constant 0.000000e+00 : f32
    %6 = vector.broadcast %cst_5 : f32 to vector<16x128xf32>
    %7 = arith.maximumf %5, %6 : vector<16x128xf32>
    %8 = arith.truncf %7 : vector<16x128xf32> to vector<16x128xbf16>
    %c0_6 = arith.constant 0 : index
    %c0_7 = arith.constant 0 : index
    %9 = vector.load %arg4[%c0_6, %c0_7] : memref<128x128xbf16, #tpu.memory_space<vmem>>, vector<128x128xbf16>
    %cst_8 = arith.constant dense<0.000000e+00> : vector<16x128xf32>
    %10 = tpu.matmul %8, %9, %cst_8 {dimension_numbers = #tpu.dot_dimension_numbers<[1], [0], [0], [1], [0, 0, 1, 1], [], []>} : vector<16x128xbf16>, vector<128x128xbf16>, vector<16x128xf32> -> vector<16x128xf32>
    %c0_9 = arith.constant 0 : index
    %c0_10 = arith.constant 0 : index
    %11 = vector.load %arg5[%c0_9, %c0_10] : memref<1x128xf32, #tpu.memory_space<vmem>>, vector<1x128xf32>
    %12 = vector.broadcast %11 : vector<1x128xf32> to vector<16x128xf32>
    %13 = arith.addf %10, %12 : vector<16x128xf32>
    %cst_11 = arith.constant 0.000000e+00 : f32
    %14 = vector.broadcast %cst_11 : f32 to vector<16x128xf32>
    %15 = arith.maximumf %13, %14 : vector<16x128xf32>
    %16 = arith.truncf %15 : vector<16x128xf32> to vector<16x128xbf16>
    %c0_12 = arith.constant 0 : index
    %c0_13 = arith.constant 0 : index
    %17 = vector.load %arg6[%c0_12, %c0_13] : memref<128x128xbf16, #tpu.memory_space<vmem>>, vector<128x128xbf16>
    %cst_14 = arith.constant dense<0.000000e+00> : vector<16x128xf32>
    %18 = tpu.matmul %16, %17, %cst_14 {dimension_numbers = #tpu.dot_dimension_numbers<[1], [0], [0], [1], [0, 0, 1, 1], [], []>} : vector<16x128xbf16>, vector<128x128xbf16>, vector<16x128xf32> -> vector<16x128xf32>
    %c0_15 = arith.constant 0 : index
    %c0_16 = arith.constant 0 : index
    %19 = vector.load %arg7[%c0_15, %c0_16] : memref<1x128xf32, #tpu.memory_space<vmem>>, vector<1x128xf32>
    %20 = vector.broadcast %19 : vector<1x128xf32> to vector<16x128xf32>
    %21 = arith.addf %18, %20 : vector<16x128xf32>
    %c0_17 = arith.constant 0 : index
    %c0_18 = arith.constant 0 : index
    %22 = vector.load %arg8[%c0_17, %c0_18] : memref<16x128xf32, #tpu.memory_space<vmem>>, vector<16x128xf32>
    tpu.vector_store %arg8[%c0_17, %c0_18], %21 {strides = array<i32>} : memref<16x128xf32, #tpu.memory_space<vmem>>, vector<16x128xf32>,
    return
  }
  func.func @transform_0(%arg0: i32) -> (i32, i32) {
    %c0_i32 = arith.constant 0 : i32
    %c0_i32_0 = arith.constant 0 : i32
    return %arg0, %c0_i32 : i32, i32
  }
  func.func @transform_1(%arg0: i32) -> (i32, i32) {
    %c0_i32 = arith.constant 0 : i32
    %c0_i32_0 = arith.constant 0 : i32
    %c0_i32_1 = arith.constant 0 : i32
    return %c0_i32, %c0_i32_0 : i32, i32
  }
  func.func @transform_2(%arg0: i32) -> (i32, i32) {
    %c0_i32 = arith.constant 0 : i32
    %c0_i32_0 = arith.constant 0 : i32
    %c0_i32_1 = arith.constant 0 : i32
    return %c0_i32, %c0_i32_0 : i32, i32
  }
  func.func @transform_3(%arg0: i32) -> (i32, i32) {
    %c0_i32 = arith.constant 0 : i32
    %c0_i32_0 = arith.constant 0 : i32
    %c0_i32_1 = arith.constant 0 : i32
    return %c0_i32, %c0_i32_0 : i32, i32
  }
  func.func @transform_4(%arg0: i32) -> (i32, i32) {
    %c0_i32 = arith.constant 0 : i32
    %c0_i32_0 = arith.constant 0 : i32
    %c0_i32_1 = arith.constant 0 : i32
    return %c0_i32, %c0_i32_0 : i32, i32
  }
  func.func @transform_5(%arg0: i32) -> (i32, i32) {
    %c0_i32 = arith.constant 0 : i32
    %c0_i32_0 = arith.constant 0 : i32
    %c0_i32_1 = arith.constant 0 : i32
    return %c0_i32, %c0_i32_0 : i32, i32
  }
  func.func @transform_6(%arg0: i32) -> (i32, i32) {
    %c0_i32 = arith.constant 0 : i32
    %c0_i32_0 = arith.constant 0 : i32
    %c0_i32_1 = arith.constant 0 : i32
    return %c0_i32, %c0_i32_0 : i32, i32
  }
  func.func @transform_7(%arg0: i32) -> (i32, i32) {
    %c0_i32 = arith.constant 0 : i32
    %c0_i32_0 = arith.constant 0 : i32
    return %arg0, %c0_i32 : i32, i32
  }
}

</mosaic_0001>

<llo_original>
// kernel: tpu_custom_call.1
$region0: #{tpu_custom_call.1}
  #allocation0 [shape = 'u32[]', space=smem, size = 0x4, offset = 0x4, fixed_abs, tag = 'smem constant byte address 0x4 - core index']
  #allocation1 [shape = 'u32[144,128]{1,0:T(1,128)}', space=vmem, size = 0x12000, scoped, tag = 'internal scratch']
  %s0 = inlined_call_operand.hbm [shape: bf16[16,32], index: 0, kind: input, shape index: {}]
  %s1 = inlined_call_operand.hbm [shape: bf16[32,128], index: 1, kind: input, shape index: {}]
  %s2 = inlined_call_operand.vmem [shape: f32[1,128], index: 2, kind: input, shape index: {}]
  %s3 = inlined_call_operand.hbm [shape: bf16[128,128], index: 3, kind: input, shape index: {}]
  %s4 = inlined_call_operand.vmem [shape: f32[1,128], index: 4, kind: input, shape index: {}]
  %s5 = inlined_call_operand.hbm [shape: bf16[128,128], index: 5, kind: input, shape index: {}]
  %s6 = inlined_call_operand.vmem [shape: f32[1,128], index: 6, kind: input, shape index: {}]
  %s7 = inlined_call_operand.hbm [shape: f32[16,128], index: 7, kind: output, shape index: {}]
  %s8 = sld [smem:[#allocation0]]
  $region54: #{tpu_custom_call.1} parent=0
    _
  %s10 = ssub.s32 1, %s8
  %s11 = scalar_select 0, %s10, %s8
  $region1: #{tpu_custom_call.1} parent=0
    #allocation2 [shape = 'u8[4096]{0}', space=vmem, size = 0x1000, scoped, tag = 'input window, operand 0, single buffered']
    #allocation3 [shape = 's32[1]{0}', space=sflag, size = 0x4, scoped, tag = 'scoped memory for tpu_custom_call.1']
    #allocation4 [shape = 's32[1]{0}', space=sflag, size = 0x4, scoped, tag = 'scoped memory for tpu_custom_call.1']
    #allocation5 [shape = 'u8[8192]{0}', space=vmem, size = 0x2000, scoped, tag = 'input window, operand 1, single buffered']
    #allocation6 [shape = 's32[1]{0}', space=sflag, size = 0x4, scoped, tag = 'scoped memory for tpu_custom_call.1']
    #allocation7 [shape = 'u8[32768]{0}', space=vmem, size = 0x8000, scoped, tag = 'input window, operand 3, single buffered']
    #allocation8 [shape = 'u8[32768]{0}', space=vmem, size = 0x8000, scoped, tag = 'input window, operand 5, single buffered']
    #allocation9 [shape = 's32[1]{0}', space=sflag, size = 0x4, scoped, tag = 'scoped memory for tpu_custom_call.1']
    #allocation10 [shape = 'u8[8192]{0}', space=vmem, size = 0x2000, scoped, tag = 'output window, operand 0, single buffered']
    %12 = vsyncpa [#allocation3], 0
    %13 = vsyncpa [#allocation6], 0
    %14 = vsyncpa [#allocation9], 0
    %15 = vsyncpa [#allocation4], 0
    // Predicated region
    $region2: #{tpu_custom_call.1} parent=1 // pred_check
      _
    $region3: #{tpu_custom_call.1} parent=1 // pred_check_branch
      %17 = sbr.rel (0) target = $region5
    $region4: #{tpu_custom_call.1} parent=1 // pred_region
      %s19 = ssub.s32 128, 128
      %20 = vsyncadd [#allocation3], %s19
      %s21 = sshll.u32 [#allocation2], 4
      %s22 = int_to_ptr.vmem [resolvable:$true] %s21
      %27 = dma.hbm_to_vmem [thread:$0]  %s0, 128, %s22, [#allocation3], 64, 64, 4
    $region5: #{tpu_custom_call.1} parent=1 // pred_fallthru
      _
    // Predicated region
    $region6: #{tpu_custom_call.1} parent=1 // pred_check
      _
    $region7: #{tpu_custom_call.1} parent=1 // pred_check_branch
      %29 = sbr.rel (0) target = $region9
    $region8: #{tpu_custom_call.1} parent=1 // pred_region
      %s31 = ssub.s32 256, 256
      %32 = vsyncadd [#allocation6], %s31
      %s33 = sshll.u32 [#allocation5], 4
      %s34 = int_to_ptr.vmem [resolvable:$true] %s33
      %39 = dma.hbm_to_vmem [thread:$0]  %s1, 256, %s34, [#allocation6], 64, 64, 4
    $region9: #{tpu_custom_call.1} parent=1 // pred_fallthru
      _
    // Predicated region
    $region10: #{tpu_custom_call.1} parent=1 // pred_check
      _
    $region11: #{tpu_custom_call.1} parent=1 // pred_check_branch
      %41 = sbr.rel (0) target = $region13
    $region12: #{tpu_custom_call.1} parent=1 // pred_region
      _
    $region13: #{tpu_custom_call.1} parent=1 // pred_fallthru
      _
    // Predicated region
    $region14: #{tpu_custom_call.1} parent=1 // pred_check
      _
    $region15: #{tpu_custom_call.1} parent=1 // pred_check_branch
      %43 = sbr.rel (0) target = $region17
    $region16: #{tpu_custom_call.1} parent=1 // pred_region
      %s45 = ssub.s32 1024, 1024
      %46 = vsyncadd [#allocation6], %s45
      %s47 = sshll.u32 [#allocation7], 4
      %s48 = int_to_ptr.vmem [resolvable:$true] %s47
      %53 = dma.hbm_to_vmem [thread:$0]  %s3, 1024, %s48, [#allocation6], 64, 64, 4
    $region17: #{tpu_custom_call.1} parent=1 // pred_fallthru
      _
    // Predicated region
    $region18: #{tpu_custom_call.1} parent=1 // pred_check
      _
    $region19: #{tpu_custom_call.1} parent=1 // pred_check_branch
      %55 = sbr.rel (0) target = $region21
    $region20: #{tpu_custom_call.1} parent=1 // pred_region
      _
    $region21: #{tpu_custom_call.1} parent=1 // pred_fallthru
      _
    // Predicated region
    $region22: #{tpu_custom_call.1} parent=1 // pred_check
      _
    $region23: #{tpu_custom_call.1} parent=1 // pred_check_branch
      %57 = sbr.rel (0) target = $region25
    $region24: #{tpu_custom_call.1} parent=1 // pred_region
      %s59 = ssub.s32 1024, 1024
      %60 = vsyncadd [#allocation9], %s59
      %s61 = sshll.u32 [#allocation8], 4
      %s62 = int_to_ptr.vmem [resolvable:$true] %s61
      %67 = dma.hbm_to_vmem [thread:$0]  %s5, 1024, %s62, [#allocation9], 64, 64, 4
    $region25: #{tpu_custom_call.1} parent=1 // pred_fallthru
      _
    // Predicated region
    $region26: #{tpu_custom_call.1} parent=1 // pred_check
      _
    $region27: #{tpu_custom_call.1} parent=1 // pred_check_branch
      %69 = sbr.rel (0) target = $region29
    $region28: #{tpu_custom_call.1} parent=1 // pred_region
      _
    $region29: #{tpu_custom_call.1} parent=1 // pred_fallthru
      _
    // Predicated region
    $region30: #{tpu_custom_call.1} parent=1 // pred_check
      _
    $region31: #{tpu_custom_call.1} parent=1 // pred_check_branch
      %71 = sbr.rel (0) target = $region33
    $region32: #{tpu_custom_call.1} parent=1 // pred_region
      %72 = dma.done [#allocation3], 128
    $region33: #{tpu_custom_call.1} parent=1 // pred_fallthru
      _
    // Predicated region
    $region34: #{tpu_custom_call.1} parent=1 // pred_check
      _
    $region35: #{tpu_custom_call.1} parent=1 // pred_check_branch
      %74 = sbr.rel (0) target = $region37
    $region36: #{tpu_custom_call.1} parent=1 // pred_region
      %75 = dma.done [#allocation6], 256
    $region37: #{tpu_custom_call.1} parent=1 // pred_fallthru
      _
    // Predicated region
    $region38: #{tpu_custom_call.1} parent=1 // pred_check
      _
    $region39: #{tpu_custom_call.1} parent=1 // pred_check_branch
      %77 = sbr.rel (0) target = $region41
    $region40: #{tpu_custom_call.1} parent=1 // pred_region
      %78 = dma.done [#allocation6], 1024
    $region41: #{tpu_custom_call.1} parent=1 // pred_fallthru
      _
    // Predicated region
    $region42: #{tpu_custom_call.1} parent=1 // pred_check
      _
    $region43: #{tpu_custom_call.1} parent=1 // pred_check_branch
      %80 = sbr.rel (0) target = $region45
    $region44: #{tpu_custom_call.1} parent=1 // pred_region
      %81 = dma.done [#allocation9], 1024
    $region45: #{tpu_custom_call.1} parent=1 // pred_fallthru
      _
    %v83 = vld [vmem:[#allocation2] sm:$0xf]
    %v84 = vld [vmem:[#allocation2 + $0x4] sm:$0xf]
    %v85 = vld [vmem:[#allocation5] sm:$0xf]
    %v86 = vld [vmem:[#allocation5 + $0x4] sm:$0xf]
    %v87 = vld [vmem:[#allocation5 + $0x8] sm:$0xf]
    %v88 = vld [vmem:[#allocation5 + $0xc] sm:$0xf]
    %v89 = vld [vmem:[%s2] sm:$0x1]
    %v91 = vlaneseq
    %v92 = vshrl.u32 %v91, 7
    %v93 = vsub.s32 0, %v92
    %v94 = vrot.slane %v89, %v93
    %v98 = vunpack.c.l.b16 %v83
    %v99 = vunpack.c.l.b16 %v84
    %v100 = vpack.c.b16 %v99, %v98
    %v105 = vunpack.c.l.b16 %v85
    %v106 = vunpack.c.l.b16 %v86
    %v107 = vunpack.c.l.b16 %v87
    %v108 = vunpack.c.l.b16 %v88
    %v109 = vpack.c.b16 %v106, %v105
    %v110 = vpack.c.b16 %v108, %v107
    %vm113 = vcmask 261120
    %v115 = vsel %vm113, %v100, 0
    %117 = vmatprep.subr.bf16.mxu0 0
    %118 = vmatpush1.bf16.msra.mxu0 %v109
    %119 = vmatprep.subr.bf16.mxu0 0
    %120 = vmatpush1.bf16.msra.mxu0 %v110
    %121 = vmatprep.subr.bf16.mxu0 0
    %122 = vmatpush1.bf16.msra.mxu0 0
    %123 = vmatprep.subr.bf16.mxu0 0
    %124 = vmatpush1.bf16.msra.mxu0 0
    %125 = vmatprep.subr.bf16.mxu0 0
    %126 = vmatpush1.bf16.msra.mxu0 0
    %127 = vmatprep.subr.bf16.mxu0 0
    %128 = vmatpush1.bf16.msra.mxu0 0
    %129 = vmatprep.subr.bf16.mxu0 0
    %130 = vmatpush1.bf16.msra.mxu0 0
    %131 = vmatprep.subr.bf16.mxu0 0
    %132 = vmatpush1.bf16.msra.mxu0 0
    %133 = vmatprep.subr.bf16.mxu0 0
    %134 = vmatpush1.bf16.msra.mxu0 0
    %135 = vmatprep.subr.bf16.mxu0 0
    %136 = vmatpush1.bf16.msra.mxu0 0
    %137 = vmatprep.subr.bf16.mxu0 0
    %138 = vmatpush1.bf16.msra.mxu0 0
    %139 = vmatprep.subr.bf16.mxu0 0
    %140 = vmatpush1.bf16.msra.mxu0 0
    %141 = vmatprep.subr.bf16.mxu0 0
    %142 = vmatpush1.bf16.msra.mxu0 0
    %143 = vmatprep.subr.bf16.mxu0 0
    %144 = vmatpush1.bf16.msra.mxu0 0
    %145 = vmatprep.subr.bf16.mxu0 0
    %146 = vmatpush1.bf16.msra.mxu0 0
    %147 = vmatprep.subr.bf16.mxu0 0
    %148 = vmatpush1.bf16.msra.mxu0 0
    %149 = vmatprep.mubr.bf16.mxu0 0
    %150 = vmatmul.mubr.bf16.gmra.mrb[0].mxu0 %v115
    %v151 = vpop.f32.mrb[0].mxu0
    %v152 = vadd.f32 %v94, %v151
    %v153 = vpop.f32.mrb[0].mxu0
    %v154 = vpop.f32.mrb[0].mxu0
    %v155 = vadd.f32 %v94, %v154
    %v156 = vpop.f32.mrb[0].mxu0
    %157 = vdwg.mxu0
    %v158 = vmax.f32 %v152, 0.0
    %v159 = vmax.f32 %v155, 0.0
    %v160 = vpack.c.bf16 %v159, %v158
    %v161 = vld [vmem:[#allocation7] sm:$0xf]
    %v162 = vld [vmem:[#allocation7 + $0x4] sm:$0xf]
    %v163 = vld [vmem:[#allocation7 + $0x8] sm:$0xf]
    %v164 = vld [vmem:[#allocation7 + $0xc] sm:$0xf]
    %v165 = vld [vmem:[#allocation7 + $0x10] sm:$0xf]
    %v166 = vld [vmem:[#allocation7 + $0x14] sm:$0xf]
    %v167 = vld [vmem:[#allocation7 + $0x18] sm:$0xf]
    %v168 = vld [vmem:[#allocation7 + $0x1c] sm:$0xf]
    %v169 = vld [vmem:[#allocation7 + $0x20] sm:$0xf]
    %v170 = vld [vmem:[#allocation7 + $0x24] sm:$0xf]
    %v171 = vld [vmem:[#allocation7 + $0x28] sm:$0xf]
    %v172 = vld [vmem:[#allocation7 + $0x2c] sm:$0xf]
    %v173 = vld [vmem:[#allocation7 + $0x30] sm:$0xf]
    %v174 = vld [vmem:[#allocation7 + $0x34] sm:$0xf]
    %v175 = vld [vmem:[#allocation7 + $0x38] sm:$0xf]
    %v176 = vld [vmem:[#allocation7 + $0x3c] sm:$0xf]
    %v177 = vld [vmem:[%s4] sm:$0x1]
    %v179 = vlaneseq
    %v180 = vshrl.u32 %v179, 7
    %v181 = vsub.s32 0, %v180
    %v182 = vrot.slane %v177, %v181
    %v200 = vunpack.c.l.b16 %v161
    %v201 = vunpack.c.l.b16 %v162
    %v202 = vunpack.c.l.b16 %v163
    %v203 = vunpack.c.l.b16 %v164
    %v204 = vunpack.c.l.b16 %v165
    %v205 = vunpack.c.l.b16 %v166
    %v206 = vunpack.c.l.b16 %v167
    %v207 = vunpack.c.l.b16 %v168
    %v208 = vunpack.c.l.b16 %v169
    %v209 = vunpack.c.l.b16 %v170
    %v210 = vunpack.c.l.b16 %v171
    %v211 = vunpack.c.l.b16 %v172
    %v212 = vunpack.c.l.b16 %v173
    %v213 = vunpack.c.l.b16 %v174
    %v214 = vunpack.c.l.b16 %v175
    %v215 = vunpack.c.l.b16 %v176
    %v216 = vpack.c.b16 %v201, %v200
    %v217 = vpack.c.b16 %v203, %v202
    %v218 = vpack.c.b16 %v205, %v204
    %v219 = vpack.c.b16 %v207, %v206
    %v220 = vpack.c.b16 %v209, %v208
    %v221 = vpack.c.b16 %v211, %v210
    %v222 = vpack.c.b16 %v213, %v212
    %v223 = vpack.c.b16 %v215, %v214
    %232 = vmatprep.subr.bf16.mxu0 0
    %233 = vmatpush1.bf16.msra.mxu0 %v216
    %234 = vmatprep.subr.bf16.mxu0 0
    %235 = vmatpush1.bf16.msra.mxu0 %v217
    %236 = vmatprep.subr.bf16.mxu0 0
    %237 = vmatpush1.bf16.msra.mxu0 %v218
    %238 = vmatprep.subr.bf16.mxu0 0
    %239 = vmatpush1.bf16.msra.mxu0 %v219
    %240 = vmatprep.subr.bf16.mxu0 0
    %241 = vmatpush1.bf16.msra.mxu0 %v220
    %242 = vmatprep.subr.bf16.mxu0 0
    %243 = vmatpush1.bf16.msra.mxu0 %v221
    %244 = vmatprep.subr.bf16.mxu0 0
    %245 = vmatpush1.bf16.msra.mxu0 %v222
    %246 = vmatprep.subr.bf16.mxu0 0
    %247 = vmatpush1.bf16.msra.mxu0 %v223
    %248 = vmatprep.subr.bf16.mxu0 0
    %249 = vmatpush1.bf16.msra.mxu0 0
    %250 = vmatprep.subr.bf16.mxu0 0
    %251 = vmatpush1.bf16.msra.mxu0 0
    %252 = vmatprep.subr.bf16.mxu0 0
    %253 = vmatpush1.bf16.msra.mxu0 0
    %254 = vmatprep.subr.bf16.mxu0 0
    %255 = vmatpush1.bf16.msra.mxu0 0
    %256 = vmatprep.subr.bf16.mxu0 0
    %257 = vmatpush1.bf16.msra.mxu0 0
    %258 = vmatprep.subr.bf16.mxu0 0
    %259 = vmatpush1.bf16.msra.mxu0 0
    %260 = vmatprep.subr.bf16.mxu0 0
    %261 = vmatpush1.bf16.msra.mxu0 0
    %262 = vmatprep.subr.bf16.mxu0 0
    %263 = vmatpush1.bf16.msra.mxu0 0
    %264 = vmatprep.mubr.bf16.mxu0 0
    %265 = vmatmul.mubr.bf16.gmra.mrb[0].mxu0 %v160
    %v266 = vpop.f32.mrb[0].mxu0
    %v267 = vadd.f32 %v182, %v266
    %v268 = vpop.f32.mrb[0].mxu0
    %v269 = vpop.f32.mrb[0].mxu0
    %v270 = vadd.f32 %v182, %v269
    %v271 = vpop.f32.mrb[0].mxu0
    %272 = vdwg.mxu0
    %v273 = vmax.f32 %v267, 0.0
    %v274 = vmax.f32 %v270, 0.0
    %v275 = vpack.c.bf16 %v274, %v273
    %v276 = vld [vmem:[#allocation8] sm:$0xf]
    %v277 = vld [vmem:[#allocation8 + $0x4] sm:$0xf]
    %v278 = vld [vmem:[#allocation8 + $0x8] sm:$0xf]
    %v279 = vld [vmem:[#allocation8 + $0xc] sm:$0xf]
    %v280 = vld [vmem:[#allocation8 + $0x10] sm:$0xf]
    %v281 = vld [vmem:[#allocation8 + $0x14] sm:$0xf]
    %v282 = vld [vmem:[#allocation8 + $0x18] sm:$0xf]
    %v283 = vld [vmem:[#allocation8 + $0x1c] sm:$0xf]
    %v284 = vld [vmem:[#allocation8 + $0x20] sm:$0xf]
    %v285 = vld [vmem:[#allocation8 + $0x24] sm:$0xf]
    %v286 = vld [vmem:[#allocation8 + $0x28] sm:$0xf]
    %v287 = vld [vmem:[#allocation8 + $0x2c] sm:$0xf]
    %v288 = vld [vmem:[#allocation8 + $0x30] sm:$0xf]
    %v289 = vld [vmem:[#allocation8 + $0x34] sm:$0xf]
    %v290 = vld [vmem:[#allocation8 + $0x38] sm:$0xf]
    %v291 = vld [vmem:[#allocation8 + $0x3c] sm:$0xf]
    %v292 = vld [vmem:[%s6] sm:$0x1]
    %v294 = vlaneseq
    %v295 = vshrl.u32 %v294, 7
    %v296 = vsub.s32 0, %v295
    %v297 = vrot.slane %v292, %v296
    %v315 = vunpack.c.l.b16 %v276
    %v316 = vunpack.c.l.b16 %v277
    %v317 = vunpack.c.l.b16 %v278
    %v318 = vunpack.c.l.b16 %v279
    %v319 = vunpack.c.l.b16 %v280
    %v320 = vunpack.c.l.b16 %v281
    %v321 = vunpack.c.l.b16 %v282
    %v322 = vunpack.c.l.b16 %v283
    %v323 = vunpack.c.l.b16 %v284
    %v324 = vunpack.c.l.b16 %v285
    %v325 = vunpack.c.l.b16 %v286
    %v326 = vunpack.c.l.b16 %v287
    %v327 = vunpack.c.l.b16 %v288
    %v328 = vunpack.c.l.b16 %v289
    %v329 = vunpack.c.l.b16 %v290
    %v330 = vunpack.c.l.b16 %v291
    %v331 = vpack.c.b16 %v316, %v315
    %v332 = vpack.c.b16 %v318, %v317
    %v333 = vpack.c.b16 %v320, %v319
    %v334 = vpack.c.b16 %v322, %v321
    %v335 = vpack.c.b16 %v324, %v323
    %v336 = vpack.c.b16 %v326, %v325
    %v337 = vpack.c.b16 %v328, %v327
    %v338 = vpack.c.b16 %v330, %v329
    %347 = vmatprep.subr.bf16.mxu0 0
    %348 = vmatpush1.bf16.msra.mxu0 %v331
    %349 = vmatprep.subr.bf16.mxu0 0
    %350 = vmatpush1.bf16.msra.mxu0 %v332
    %351 = vmatprep.subr.bf16.mxu0 0
    %352 = vmatpush1.bf16.msra.mxu0 %v333
    %353 = vmatprep.subr.bf16.mxu0 0
    %354 = vmatpush1.bf16.msra.mxu0 %v334
    %355 = vmatprep.subr.bf16.mxu0 0
    %356 = vmatpush1.bf16.msra.mxu0 %v335
    %357 = vmatprep.subr.bf16.mxu0 0
    %358 = vmatpush1.bf16.msra.mxu0 %v336
    %359 = vmatprep.subr.bf16.mxu0 0
    %360 = vmatpush1.bf16.msra.mxu0 %v337
    %361 = vmatprep.subr.bf16.mxu0 0
    %362 = vmatpush1.bf16.msra.mxu0 %v338
    %363 = vmatprep.subr.bf16.mxu0 0
    %364 = vmatpush1.bf16.msra.mxu0 0
    %365 = vmatprep.subr.bf16.mxu0 0
    %366 = vmatpush1.bf16.msra.mxu0 0
    %367 = vmatprep.subr.bf16.mxu0 0
    %368 = vmatpush1.bf16.msra.mxu0 0
    %369 = vmatprep.subr.bf16.mxu0 0
    %370 = vmatpush1.bf16.msra.mxu0 0
    %371 = vmatprep.subr.bf16.mxu0 0
    %372 = vmatpush1.bf16.msra.mxu0 0
    %373 = vmatprep.subr.bf16.mxu0 0
    %374 = vmatpush1.bf16.msra.mxu0 0
    %375 = vmatprep.subr.bf16.mxu0 0
    %376 = vmatpush1.bf16.msra.mxu0 0
    %377 = vmatprep.subr.bf16.mxu0 0
    %378 = vmatpush1.bf16.msra.mxu0 0
    %379 = vmatprep.mubr.bf16.mxu0 0
    %380 = vmatmul.mubr.bf16.gmra.mrb[0].mxu0 %v275
    %v381 = vpop.f32.mrb[0].mxu0
    %v382 = vadd.f32 %v297, %v381
    %v383 = vpop.f32.mrb[0].mxu0
    %v384 = vpop.f32.mrb[0].mxu0
    %v385 = vadd.f32 %v297, %v384
    %v386 = vpop.f32.mrb[0].mxu0
    %387 = vdwg.mxu0
    %388 = vst [vmem:[#allocation10] sm:$0xff] %v382
    %389 = vst [vmem:[#allocation10 + $0x8] sm:$0xff] %v385
    // Predicated region
    $region46: #{tpu_custom_call.1} parent=1 // pred_check
      _
    $region47: #{tpu_custom_call.1} parent=1 // pred_check_branch
      %391 = sbr.rel (0) target = $region49
    $region48: #{tpu_custom_call.1} parent=1 // pred_region
      %s393 = ssub.s32 256, 256
      %394 = vsyncadd [#allocation4], %s393
      %s395 = sshll.u32 [#allocation10], 4
      %s396 = int_to_ptr.vmem [resolvable:$true] %s395
      %401 = dma.vmem_to_hbm [thread:$0]  %s396, 256, %s7, [#allocation4], 128, 128, 8
    $region49: #{tpu_custom_call.1} parent=1 // pred_fallthru
      _
    // Predicated region
    $region50: #{tpu_custom_call.1} parent=1 // pred_check
      _
    $region51: #{tpu_custom_call.1} parent=1 // pred_check_branch
      %403 = sbr.rel (0) target = $region53
    $region52: #{tpu_custom_call.1} parent=1 // pred_region
      %404 = dma.done [#allocation4], 256
    $region53: #{tpu_custom_call.1} parent=1 // pred_fallthru
      _
    %405 = vsyncpa [#allocation3], 1
    %406 = vsyncpa [#allocation6], 1
    %407 = vsyncpa [#allocation9], 1
    %408 = vsyncpa [#allocation4], 1

</llo_original>
